<compile_context>
chip_gen: v7x
topology: tpu7x:2x2x1
jax: 0.10.0
libtpu: 0.0.40
codegen_flags: <defaults>
</compile_context>

<pallas_src>
import functools

import jax
import jax.numpy as jnp
from jax.experimental import pallas as pl

NUM_GROUND_FEATURES = 1
NUM_OUTDOOR_FEATURES = 3
NUM_ZONE_FEATURES = 2
NUM_HIDDEN = 64

SUBLANE = 8
LANE = 128


def _round_up(x, m):
    return ((x + m - 1) // m) * m


def _pad2(x, shape):
    return jnp.pad(x, ((0, shape[0] - x.shape[0]), (0, shape[1] - x.shape[1])))


# ----------------------------------------------------------------------------
# Fused Pallas kernel (single invocation, no grid).  For each graph g:
#   o_g = relu(A_hat_g @ (X_g @ W_g) + b_g)
# All matmuls are f32 rank-1 broadcast accumulations on the VPU (K <= 8).
# ----------------------------------------------------------------------------
def _fused_gcn_kernel(a_ref, xz_ref, xo_ref, xg_ref, wb_ref, o_ref):
    bias_row = wb_ref.shape[1] - 1          # last row of wb holds the bias
    for g, x_ref in enumerate((xz_ref, xo_ref, xg_ref)):   # unrolled (3 graphs)
        x = x_ref[...]                      # (n_g, f_g)   f32, unpadded
        n_g, f_g = x.shape
        wb = wb_ref[g]                      # (f_max+1, h_p) f32
        a = a_ref[g]                        # (n_p, n_p)   f32, zero in padding
        # X @ W on the VPU: f_g (<=3) rank-1 broadcast products.
        xw = x[:, 0:1] * wb[0:1, :]
        for k in range(1, f_g):
            xw = xw + x[:, k:k + 1] * wb[k:k + 1, :]
        # A_hat @ (X W) on the VPU in f32: n_g (<=8) rank-1 broadcast products.
        # Columns j >= n_g of A_hat are exactly zero (padded nodes have no
        # edges / self-loops), so they are skipped.
        axw = a[:, 0:1] * xw[0:1, :]
        for j in range(1, n_g):
            axw = axw + a[:, j:j + 1] * xw[j:j + 1, :]
        # Bias + ReLU.  Padded output rows evaluate to relu(bias) == 0 with the
        # PyG zero-init bias and are sliced off by the wrapper anyway.
        o_ref[g] = jnp.maximum(axw + wb[bias_row:bias_row + 1, :], 0.0)


def fused_gcn_pallas(a_stack, x_zone, x_outdoor, x_ground, wb_stack):
    g, n_p, _ = a_stack.shape
    h_p = wb_stack.shape[2]
    return pl.pallas_call(
        _fused_gcn_kernel,
        out_shape=jax.ShapeDtypeStruct((g, n_p, h_p), jnp.float32),
        # No grid / no BlockSpecs: every operand is one full-array VMEM block
        # (single DMA each); total footprint is a few KB.
    )(a_stack, x_zone, x_outdoor, x_ground, wb_stack)


# ----------------------------------------------------------------------------
# GCN normalization -> dense normalized adjacency A_hat, built at padded size.
# Mirrors torch_geometric gcn_norm (add_self_loops=True, fill_value=1), using
# one-hot matmuls instead of a serialized TPU scatter.  Runs ONCE at prepare
# time (edge structure and edge_attr are fixed module parameters), never in
# the jitted forward path.
# ----------------------------------------------------------------------------
def gcn_norm_dense(edge_index, edge_weight, num_nodes, pad_to):
    src = edge_index[0]
    dst = edge_index[1]
    loop = jnp.arange(num_nodes, dtype=src.dtype)
    src = jnp.concatenate([src, loop])
    dst = jnp.concatenate([dst, loop])
    w = jnp.concatenate(
        [edge_weight.reshape(-1).astype(jnp.float32),
         jnp.ones((num_nodes,), jnp.float32)]
    )
    src_oh = jax.nn.one_hot(src, pad_to, dtype=jnp.float32)     # [E', n_p]
    dst_oh = jax.nn.one_hot(dst, pad_to, dtype=jnp.float32)     # [E', n_p]
    deg = w @ dst_oh                                            # in-degree
    deg_inv_sqrt = jnp.where(
        deg > 0, jax.lax.rsqrt(jnp.maximum(deg, 1e-12)), 0.0)
    norm = (src_oh @ deg_inv_sqrt) * w * (dst_oh @ deg_inv_sqrt)
    # A_hat[dst, src] += norm   (message flows src -> dst); padded rows/cols
    # stay exactly zero because padded nodes have no edges or self-loops.
    return (dst_oh * norm[:, None]).T @ src_oh                  # [n_p, n_p]


def prepare_graphs(edge_index_zone, edge_attr_zone, n_zone,
                   edge_index_outdoor, edge_attr_outdoor, n_outdoor,
                   edge_index_ground, edge_attr_ground, n_ground, n_p):
    return jnp.stack([
        gcn_norm_dense(edge_index_zone, edge_attr_zone, n_zone, n_p),
        gcn_norm_dense(edge_index_outdoor, edge_attr_outdoor, n_outdoor, n_p),
        gcn_norm_dense(edge_index_ground, edge_attr_ground, n_ground, n_p),
    ])


# ----------------------------------------------------------------------------
# One-time parameter preparation: W and b concatenated into a single padded
# [3, f_max+1, h_p] operand (bias in the last row).
# ----------------------------------------------------------------------------
def prepare_params(params, f_max, h_p):
    def _wb(w, b):
        w_p = _pad2(w.astype(jnp.float32), (f_max, h_p))
        b_p = _pad2(b.reshape(1, -1).astype(jnp.float32), (1, h_p))
        return jnp.concatenate([w_p, b_p], axis=0)
    return jnp.stack([
        _wb(params["w_zone"], params["b_zone"]),
        _wb(params["w_outdoor"], params["b_outdoor"]),
        _wb(params["w_ground"], params["b_ground"]),
    ])


# ----------------------------------------------------------------------------
# ThermalGCN forward: three GCNConv + ReLU, one fused Pallas call, no wrapper
# pad/stack ops in the hot path.
# ----------------------------------------------------------------------------
def thermal_gcn_forward(a_stack, wb_stack, x_zone, x_outdoor, x_ground):
    n_z = x_zone.shape[0]
    n_o = x_outdoor.shape[0]
    n_g = x_ground.shape[0]
    out = fused_gcn_pallas(a_stack,
                           x_zone.astype(jnp.float32),
                           x_outdoor.astype(jnp.float32),
                           x_ground.astype(jnp.float32),
                           wb_stack)
    h = NUM_HIDDEN
    return out[0, :n_z, :h], out[1, :n_o, :h], out[2, :n_g, :h]


# ----------------------------------------------------------------------------
# Input construction (deterministic, in-script).
# ----------------------------------------------------------------------------
def make_edge_index(pairs):
    # make graph bidirectional, shape [2, E]
    src = [a for a, b in pairs] + [b for a, b in pairs]
    dst = [b for a, b in pairs] + [a for a, b in pairs]
    return jnp.array([src, dst], dtype=jnp.int32)


def _reference_layer(a_hat, x, w, b):
    hi = jax.lax.Precision.HIGHEST
    xw = jnp.dot(x.astype(jnp.float32), w, precision=hi)
    return jnp.maximum(jnp.dot(a_hat, xw, precision=hi) + b, 0.0)


if __name__ == "__main__":
    key = jax.random.PRNGKey(0)
    ks = jax.random.split(key, 10)

    # TODO(synk): lp.generate_connections('./in.idf') parses an EnergyPlus IDF;
    # replaced with a synthetic deterministic zone connectivity graph.
    num_zone_nodes = 6
    edge_index_zone = make_edge_index(
        [(0, 1), (1, 2), (2, 3), (3, 4), (4, 5), (5, 0), (0, 3)])
    edge_index_outdoor = make_edge_index([(0, 1), (1, 2), (2, 0)])
    edge_index_ground = make_edge_index([(0, 1)])

    num_edges_zone = edge_index_zone.shape[1]
    num_edges_outdoor = edge_index_outdoor.shape[1]
    num_edges_ground = edge_index_ground.shape[1]

    # Node features (torch.randn analogues)
    x_zone = jax.random.normal(ks[0], (num_zone_nodes, NUM_ZONE_FEATURES),
                               jnp.float32)
    x_outdoor = jax.random.normal(ks[1], (3, NUM_OUTDOOR_FEATURES), jnp.float32)
    x_ground = jax.random.normal(ks[2], (2, NUM_GROUND_FEATURES), jnp.float32)

    # GCNConv weights (lin: in -> hidden), biases zero-init as in PyG.
    params = {
        "w_zone": jax.random.normal(ks[3], (NUM_ZONE_FEATURES, NUM_HIDDEN),
                                    jnp.float32) * 0.5,
        "b_zone": jnp.zeros((NUM_HIDDEN,), jnp.float32),
        "w_outdoor": jax.random.normal(ks[4], (NUM_OUTDOOR_FEATURES, NUM_HIDDEN),
                                       jnp.float32) * 0.5,
        "b_outdoor": jnp.zeros((NUM_HIDDEN,), jnp.float32),
        "w_ground": jax.random.normal(ks[5], (NUM_GROUND_FEATURES, NUM_HIDDEN),
                                      jnp.float32) * 0.5,
        "b_ground": jnp.zeros((NUM_HIDDEN,), jnp.float32),
        # Edge attributes: module uses randn; shifted positive here so the
        # symmetric GCN degree normalization (deg^-1/2) stays finite.
        "edge_attr_zone": jnp.abs(
            jax.random.normal(ks[6], (num_edges_zone, 1), jnp.float32)) + 0.1,
        "edge_attr_outdoor": jnp.abs(
            jax.random.normal(ks[7], (num_edges_outdoor, 1), jnp.float32)) + 0.1,
        "edge_attr_ground": jnp.abs(
            jax.random.normal(ks[8], (num_edges_ground, 1), jnp.float32)) + 0.1,
    }

    # ---- One-time preparation (hoisted out of the jitted forward path) ----
    n_p = _round_up(max(num_zone_nodes, 3, 2, SUBLANE), SUBLANE)
    f_max = max(NUM_ZONE_FEATURES, NUM_OUTDOOR_FEATURES, NUM_GROUND_FEATURES)
    h_p = _round_up(max(NUM_HIDDEN, LANE), LANE)

    a_stack = prepare_graphs(
        edge_index_zone, params["edge_attr_zone"], num_zone_nodes,
        edge_index_outdoor, params["edge_attr_outdoor"], 3,
        edge_index_ground, params["edge_attr_ground"], 2, n_p)
    wb_stack = prepare_params(params, f_max, h_p)

    fwd = jax.jit(functools.partial(thermal_gcn_forward, a_stack, wb_stack))

    out_zone, out_outdoor, out_ground = fwd(x_zone, x_outdoor, x_ground)
    jax.block_until_ready((out_zone, out_outdoor, out_ground))

    # Shape / sanity checks.
    assert out_zone.shape == (num_zone_nodes, NUM_HIDDEN)
    assert out_outdoor.shape == (3, NUM_HIDDEN)
    assert out_ground.shape == (2, NUM_HIDDEN)
    assert bool(jnp.all(out_zone >= 0)) and bool(jnp.all(jnp.isfinite(out_zone)))
    assert bool(jnp.all(out_outdoor >= 0)) and bool(jnp.all(out_ground >= 0))

    # Numerical check vs. plain-JAX reference (f32 VPU path -> tight tolerance).
    ref_zone = _reference_layer(
        gcn_norm_dense(edge_index_zone, params["edge_attr_zone"],
                       num_zone_nodes, num_zone_nodes),
        x_zone, params["w_zone"], params["b_zone"])
    ref_outdoor = _reference_layer(
        gcn_norm_dense(edge_index_outdoor, params["edge_attr_outdoor"], 3, 3),
        x_outdoor, params["w_outdoor"], params["b_outdoor"])
    ref_ground = _reference_layer(
        gcn_norm_dense(edge_index_ground, params["edge_attr_ground"], 2, 2),
        x_ground, params["w_ground"], params["b_ground"])
    assert bool(jnp.allclose(out_zone, ref_zone, rtol=1e-4, atol=1e-4))
    assert bool(jnp.allclose(out_outdoor, ref_outdoor, rtol=1e-4, atol=1e-4))
    assert bool(jnp.allclose(out_ground, ref_ground, rtol=1e-4, atol=1e-4))

    print("KERNEL_OK")
</pallas_src>

<mosaic_0001>
module attributes {stable_mosaic.version = 11 : i64} {
  func.func @_fused_gcn_kernel(%arg0: memref<3x8x8xf32, #tpu.memory_space<vmem>>, %arg1: memref<6x2xf32, #tpu.memory_space<vmem>>, %arg2: memref<3x3xf32, #tpu.memory_space<vmem>>, %arg3: memref<2x1xf32, #tpu.memory_space<vmem>>, %arg4: memref<3x4x128xf32, #tpu.memory_space<vmem>>, %arg5: memref<3x8x128xf32, #tpu.memory_space<vmem>>) attributes {dimension_semantics = [], scalar_prefetch = 0 : i64, scratch_operands = 0 : i64, tpu.core_type = #tpu.core_type<tc>} {
    %c0 = arith.constant 0 : index
    %c0_0 = arith.constant 0 : index
    %0 = vector.load %arg1[%c0, %c0_0] : memref<6x2xf32, #tpu.memory_space<vmem>>, vector<6x2xf32>
    %c0_1 = arith.constant 0 : index
    %c0_2 = arith.constant 0 : index
    %c0_3 = arith.constant 0 : index
    %1 = vector.load %arg4[%c0_1, %c0_2, %c0_3] : memref<3x4x128xf32, #tpu.memory_space<vmem>>, vector<1x4x128xf32>
    %2 = vector.shape_cast %1 : vector<1x4x128xf32> to vector<4x128xf32>
    %c0_4 = arith.constant 0 : index
    %c0_5 = arith.constant 0 : index
    %c0_6 = arith.constant 0 : index
    %3 = vector.load %arg0[%c0_4, %c0_5, %c0_6] : memref<3x8x8xf32, #tpu.memory_space<vmem>>, vector<1x8x8xf32>
    %4 = vector.shape_cast %3 : vector<1x8x8xf32> to vector<8x8xf32>
    %5 = vector.extract_strided_slice %0 {offsets = [0, 0], sizes = [6, 1], strides = [1, 1]} : vector<6x2xf32> to vector<6x1xf32>
    %6 = vector.extract_strided_slice %2 {offsets = [0, 0], sizes = [1, 128], strides = [1, 1]} : vector<4x128xf32> to vector<1x128xf32>
    %7 = vector.broadcast %5 : vector<6x1xf32> to vector<6x128xf32>
    %8 = vector.broadcast %6 : vector<1x128xf32> to vector<6x128xf32>
    %9 = arith.mulf %7, %8 : vector<6x128xf32>
    %10 = vector.extract_strided_slice %0 {offsets = [0, 1], sizes = [6, 1], strides = [1, 1]} : vector<6x2xf32> to vector<6x1xf32>
    %11 = vector.extract_strided_slice %2 {offsets = [1, 0], sizes = [1, 128], strides = [1, 1]} : vector<4x128xf32> to vector<1x128xf32>
    %12 = vector.broadcast %10 : vector<6x1xf32> to vector<6x128xf32>
    %13 = vector.broadcast %11 : vector<1x128xf32> to vector<6x128xf32>
    %14 = arith.mulf %12, %13 : vector<6x128xf32>
    %15 = arith.addf %9, %14 : vector<6x128xf32>
    %16 = vector.extract_strided_slice %4 {offsets = [0, 0], sizes = [8, 1], strides = [1, 1]} : vector<8x8xf32> to vector<8x1xf32>
    %17 = vector.extract_strided_slice %15 {offsets = [0, 0], sizes = [1, 128], strides = [1, 1]} : vector<6x128xf32> to vector<1x128xf32>
    %18 = vector.broadcast %16 : vector<8x1xf32> to vector<8x128xf32>
    %19 = vector.broadcast %17 : vector<1x128xf32> to vector<8x128xf32>
    %20 = arith.mulf %18, %19 : vector<8x128xf32>
    %21 = vector.extract_strided_slice %4 {offsets = [0, 1], sizes = [8, 1], strides = [1, 1]} : vector<8x8xf32> to vector<8x1xf32>
    %22 = vector.extract_strided_slice %15 {offsets = [1, 0], sizes = [1, 128], strides = [1, 1]} : vector<6x128xf32> to vector<1x128xf32>
    %23 = vector.broadcast %21 : vector<8x1xf32> to vector<8x128xf32>
    %24 = vector.broadcast %22 : vector<1x128xf32> to vector<8x128xf32>
    %25 = arith.mulf %23, %24 : vector<8x128xf32>
    %26 = arith.addf %20, %25 : vector<8x128xf32>
    %27 = vector.extract_strided_slice %4 {offsets = [0, 2], sizes = [8, 1], strides = [1, 1]} : vector<8x8xf32> to vector<8x1xf32>
    %28 = vector.extract_strided_slice %15 {offsets = [2, 0], sizes = [1, 128], strides = [1, 1]} : vector<6x128xf32> to vector<1x128xf32>
    %29 = vector.broadcast %27 : vector<8x1xf32> to vector<8x128xf32>
    %30 = vector.broadcast %28 : vector<1x128xf32> to vector<8x128xf32>
    %31 = arith.mulf %29, %30 : vector<8x128xf32>
    %32 = arith.addf %26, %31 : vector<8x128xf32>
    %33 = vector.extract_strided_slice %4 {offsets = [0, 3], sizes = [8, 1], strides = [1, 1]} : vector<8x8xf32> to vector<8x1xf32>
    %34 = vector.extract_strided_slice %15 {offsets = [3, 0], sizes = [1, 128], strides = [1, 1]} : vector<6x128xf32> to vector<1x128xf32>
    %35 = vector.broadcast %33 : vector<8x1xf32> to vector<8x128xf32>
    %36 = vector.broadcast %34 : vector<1x128xf32> to vector<8x128xf32>
    %37 = arith.mulf %35, %36 : vector<8x128xf32>
    %38 = arith.addf %32, %37 : vector<8x128xf32>
    %39 = vector.extract_strided_slice %4 {offsets = [0, 4], sizes = [8, 1], strides = [1, 1]} : vector<8x8xf32> to vector<8x1xf32>
    %40 = vector.extract_strided_slice %15 {offsets = [4, 0], sizes = [1, 128], strides = [1, 1]} : vector<6x128xf32> to vector<1x128xf32>
    %41 = vector.broadcast %39 : vector<8x1xf32> to vector<8x128xf32>
    %42 = vector.broadcast %40 : vector<1x128xf32> to vector<8x128xf32>
    %43 = arith.mulf %41, %42 : vector<8x128xf32>
    %44 = arith.addf %38, %43 : vector<8x128xf32>
    %45 = vector.extract_strided_slice %4 {offsets = [0, 5], sizes = [8, 1], strides = [1, 1]} : vector<8x8xf32> to vector<8x1xf32>
    %46 = vector.extract_strided_slice %15 {offsets = [5, 0], sizes = [1, 128], strides = [1, 1]} : vector<6x128xf32> to vector<1x128xf32>
    %47 = vector.broadcast %45 : vector<8x1xf32> to vector<8x128xf32>
    %48 = vector.broadcast %46 : vector<1x128xf32> to vector<8x128xf32>
    %49 = arith.mulf %47, %48 : vector<8x128xf32>
    %50 = arith.addf %44, %49 : vector<8x128xf32>
    %51 = vector.extract_strided_slice %2 {offsets = [3, 0], sizes = [1, 128], strides = [1, 1]} : vector<4x128xf32> to vector<1x128xf32>
    %52 = vector.broadcast %51 : vector<1x128xf32> to vector<8x128xf32>
    %53 = arith.addf %50, %52 : vector<8x128xf32>
    %cst = arith.constant 0.000000e+00 : f32
    %54 = vector.broadcast %cst : f32 to vector<8x128xf32>
    %55 = arith.maximumf %53, %54 : vector<8x128xf32>
    %c0_7 = arith.constant 0 : index
    %c0_8 = arith.constant 0 : index
    %c0_9 = arith.constant 0 : index
    %56 = vector.load %arg5[%c0_7, %c0_8, %c0_9] : memref<3x8x128xf32, #tpu.memory_space<vmem>>, vector<1x8x128xf32>
    %57 = vector.shape_cast %56 : vector<1x8x128xf32> to vector<8x128xf32>
    %58 = vector.shape_cast %55 : vector<8x128xf32> to vector<1x8x128xf32>
    tpu.vector_store %arg5[%c0_7, %c0_8, %c0_9], %58 {strides = array<i32>} : memref<3x8x128xf32, #tpu.memory_space<vmem>>, vector<1x8x128xf32>,
    %c0_10 = arith.constant 0 : index
    %c0_11 = arith.constant 0 : index
    %59 = vector.load %arg2[%c0_10, %c0_11] : memref<3x3xf32, #tpu.memory_space<vmem>>, vector<3x3xf32>
    %c1 = arith.constant 1 : index
    %c0_12 = arith.constant 0 : index
    %c0_13 = arith.constant 0 : index
    %60 = vector.load %arg4[%c1, %c0_12, %c0_13] : memref<3x4x128xf32, #tpu.memory_space<vmem>>, vector<1x4x128xf32>
    %61 = vector.shape_cast %60 : vector<1x4x128xf32> to vector<4x128xf32>
    %c1_14 = arith.constant 1 : index
    %c0_15 = arith.constant 0 : index
    %c0_16 = arith.constant 0 : index
    %62 = vector.load %arg0[%c1_14, %c0_15, %c0_16] : memref<3x8x8xf32, #tpu.memory_space<vmem>>, vector<1x8x8xf32>
    %63 = vector.shape_cast %62 : vector<1x8x8xf32> to vector<8x8xf32>
    %64 = vector.extract_strided_slice %59 {offsets = [0, 0], sizes = [3, 1], strides = [1, 1]} : vector<3x3xf32> to vector<3x1xf32>
    %65 = vector.extract_strided_slice %61 {offsets = [0, 0], sizes = [1, 128], strides = [1, 1]} : vector<4x128xf32> to vector<1x128xf32>
    %66 = vector.broadcast %64 : vector<3x1xf32> to vector<3x128xf32>
    %67 = vector.broadcast %65 : vector<1x128xf32> to vector<3x128xf32>
    %68 = arith.mulf %66, %67 : vector<3x128xf32>
    %69 = vector.extract_strided_slice %59 {offsets = [0, 1], sizes = [3, 1], strides = [1, 1]} : vector<3x3xf32> to vector<3x1xf32>
    %70 = vector.extract_strided_slice %61 {offsets = [1, 0], sizes = [1, 128], strides = [1, 1]} : vector<4x128xf32> to vector<1x128xf32>
    %71 = vector.broadcast %69 : vector<3x1xf32> to vector<3x128xf32>
    %72 = vector.broadcast %70 : vector<1x128xf32> to vector<3x128xf32>
    %73 = arith.mulf %71, %72 : vector<3x128xf32>
    %74 = arith.addf %68, %73 : vector<3x128xf32>
    %75 = vector.extract_strided_slice %59 {offsets = [0, 2], sizes = [3, 1], strides = [1, 1]} : vector<3x3xf32> to vector<3x1xf32>
    %76 = vector.extract_strided_slice %61 {offsets = [2, 0], sizes = [1, 128], strides = [1, 1]} : vector<4x128xf32> to vector<1x128xf32>
    %77 = vector.broadcast %75 : vector<3x1xf32> to vector<3x128xf32>
    %78 = vector.broadcast %76 : vector<1x128xf32> to vector<3x128xf32>
    %79 = arith.mulf %77, %78 : vector<3x128xf32>
    %80 = arith.addf %74, %79 : vector<3x128xf32>
    %81 = vector.extract_strided_slice %63 {offsets = [0, 0], sizes = [8, 1], strides = [1, 1]} : vector<8x8xf32> to vector<8x1xf32>
    %82 = vector.extract_strided_slice %80 {offsets = [0, 0], sizes = [1, 128], strides = [1, 1]} : vector<3x128xf32> to vector<1x128xf32>
    %83 = vector.broadcast %81 : vector<8x1xf32> to vector<8x128xf32>
    %84 = vector.broadcast %82 : vector<1x128xf32> to vector<8x128xf32>
    %85 = arith.mulf %83, %84 : vector<8x128xf32>
    %86 = vector.extract_strided_slice %63 {offsets = [0, 1], sizes = [8, 1], strides = [1, 1]} : vector<8x8xf32> to vector<8x1xf32>
    %87 = vector.extract_strided_slice %80 {offsets = [1, 0], sizes = [1, 128], strides = [1, 1]} : vector<3x128xf32> to vector<1x128xf32>
    %88 = vector.broadcast %86 : vector<8x1xf32> to vector<8x128xf32>
    %89 = vector.broadcast %87 : vector<1x128xf32> to vector<8x128xf32>
    %90 = arith.mulf %88, %89 : vector<8x128xf32>
    %91 = arith.addf %85, %90 : vector<8x128xf32>
    %92 = vector.extract_strided_slice %63 {offsets = [0, 2], sizes = [8, 1], strides = [1, 1]} : vector<8x8xf32> to vector<8x1xf32>
    %93 = vector.extract_strided_slice %80 {offsets = [2, 0], sizes = [1, 128], strides = [1, 1]} : vector<3x128xf32> to vector<1x128xf32>
    %94 = vector.broadcast %92 : vector<8x1xf32> to vector<8x128xf32>
    %95 = vector.broadcast %93 : vector<1x128xf32> to vector<8x128xf32>
    %96 = arith.mulf %94, %95 : vector<8x128xf32>
    %97 = arith.addf %91, %96 : vector<8x128xf32>
    %98 = vector.extract_strided_slice %61 {offsets = [3, 0], sizes = [1, 128], strides = [1, 1]} : vector<4x128xf32> to vector<1x128xf32>
    %99 = vector.broadcast %98 : vector<1x128xf32> to vector<8x128xf32>
    %100 = arith.addf %97, %99 : vector<8x128xf32>
    %cst_17 = arith.constant 0.000000e+00 : f32
    %101 = vector.broadcast %cst_17 : f32 to vector<8x128xf32>
    %102 = arith.maximumf %100, %101 : vector<8x128xf32>
    %c1_18 = arith.constant 1 : index
    %c0_19 = arith.constant 0 : index
    %c0_20 = arith.constant 0 : index
    %103 = vector.load %arg5[%c1_18, %c0_19, %c0_20] : memref<3x8x128xf32, #tpu.memory_space<vmem>>, vector<1x8x128xf32>
    %104 = vector.shape_cast %103 : vector<1x8x128xf32> to vector<8x128xf32>
    %105 = vector.shape_cast %102 : vector<8x128xf32> to vector<1x8x128xf32>
    tpu.vector_store %arg5[%c1_18, %c0_19, %c0_20], %105 {strides = array<i32>} : memref<3x8x128xf32, #tpu.memory_space<vmem>>, vector<1x8x128xf32>,
    %c0_21 = arith.constant 0 : index
    %c0_22 = arith.constant 0 : index
    %106 = vector.load %arg3[%c0_21, %c0_22] : memref<2x1xf32, #tpu.memory_space<vmem>>, vector<2x1xf32>
    %c2 = arith.constant 2 : index
    %c0_23 = arith.constant 0 : index
    %c0_24 = arith.constant 0 : index
    %107 = vector.load %arg4[%c2, %c0_23, %c0_24] : memref<3x4x128xf32, #tpu.memory_space<vmem>>, vector<1x4x128xf32>
    %108 = vector.shape_cast %107 : vector<1x4x128xf32> to vector<4x128xf32>
    %c2_25 = arith.constant 2 : index
    %c0_26 = arith.constant 0 : index
    %c0_27 = arith.constant 0 : index
    %109 = vector.load %arg0[%c2_25, %c0_26, %c0_27] : memref<3x8x8xf32, #tpu.memory_space<vmem>>, vector<1x8x8xf32>
    %110 = vector.shape_cast %109 : vector<1x8x8xf32> to vector<8x8xf32>
    %111 = vector.extract_strided_slice %108 {offsets = [0, 0], sizes = [1, 128], strides = [1, 1]} : vector<4x128xf32> to vector<1x128xf32>
    %112 = vector.broadcast %106 : vector<2x1xf32> to vector<2x128xf32>
    %113 = vector.broadcast %111 : vector<1x128xf32> to vector<2x128xf32>
    %114 = arith.mulf %112, %113 : vector<2x128xf32>
    %115 = vector.extract_strided_slice %110 {offsets = [0, 0], sizes = [8, 1], strides = [1, 1]} : vector<8x8xf32> to vector<8x1xf32>
    %116 = vector.extract_strided_slice %114 {offsets = [0, 0], sizes = [1, 128], strides = [1, 1]} : vector<2x128xf32> to vector<1x128xf32>
    %117 = vector.broadcast %115 : vector<8x1xf32> to vector<8x128xf32>
    %118 = vector.broadcast %116 : vector<1x128xf32> to vector<8x128xf32>
    %119 = arith.mulf %117, %118 : vector<8x128xf32>
    %120 = vector.extract_strided_slice %110 {offsets = [0, 1], sizes = [8, 1], strides = [1, 1]} : vector<8x8xf32> to vector<8x1xf32>
    %121 = vector.extract_strided_slice %114 {offsets = [1, 0], sizes = [1, 128], strides = [1, 1]} : vector<2x128xf32> to vector<1x128xf32>
    %122 = vector.broadcast %120 : vector<8x1xf32> to vector<8x128xf32>
    %123 = vector.broadcast %121 : vector<1x128xf32> to vector<8x128xf32>
    %124 = arith.mulf %122, %123 : vector<8x128xf32>
    %125 = arith.addf %119, %124 : vector<8x128xf32>
    %126 = vector.extract_strided_slice %108 {offsets = [3, 0], sizes = [1, 128], strides = [1, 1]} : vector<4x128xf32> to vector<1x128xf32>
    %127 = vector.broadcast %126 : vector<1x128xf32> to vector<8x128xf32>
    %128 = arith.addf %125, %127 : vector<8x128xf32>
    %cst_28 = arith.constant 0.000000e+00 : f32
    %129 = vector.broadcast %cst_28 : f32 to vector<8x128xf32>
    %130 = arith.maximumf %128, %129 : vector<8x128xf32>
    %c2_29 = arith.constant 2 : index
    %c0_30 = arith.constant 0 : index
    %c0_31 = arith.constant 0 : index
    %131 = vector.load %arg5[%c2_29, %c0_30, %c0_31] : memref<3x8x128xf32, #tpu.memory_space<vmem>>, vector<1x8x128xf32>
    %132 = vector.shape_cast %131 : vector<1x8x128xf32> to vector<8x128xf32>
    %133 = vector.shape_cast %130 : vector<8x128xf32> to vector<1x8x128xf32>
    tpu.vector_store %arg5[%c2_29, %c0_30, %c0_31], %133 {strides = array<i32>} : memref<3x8x128xf32, #tpu.memory_space<vmem>>, vector<1x8x128xf32>,
    return
  }
}

</mosaic_0001>

<llo_original>
// kernel: thermal_gcn_forward.1
$region0: #{thermal_gcn_forward.1}
  #allocation0 [shape = 'u32[]', space=smem, size = 0x4, offset = 0x4, fixed_abs, tag = 'smem constant byte address 0x4 - core index']
  #allocation1 [shape = 'u32[144,128]{1,0:T(1,128)}', space=vmem, size = 0x12000, scoped, tag = 'internal scratch']
  %s0 = inlined_call_operand.vmem [shape: f32[3,8,8], index: 0, kind: input, shape index: {}]
  %s1 = inlined_call_operand.vmem [shape: f32[6,2], index: 1, kind: input, shape index: {}]
  %s2 = inlined_call_operand.hbm [shape: f32[3,3], index: 2, kind: input, shape index: {}]
  %s3 = inlined_call_operand.vmem [shape: f32[2,1], index: 3, kind: input, shape index: {}]
  %s4 = inlined_call_operand.hbm [shape: f32[3,4,128], index: 4, kind: input, shape index: {}]
  %s5 = inlined_call_operand.vmem [shape: f32[3,8,128], index: 5, kind: output, shape index: {}]
  %s6 = sld [smem:[#allocation0]]
  $region38: #{thermal_gcn_forward.1} parent=0
    _
  %s8 = ssub.s32 1, %s6
  %s9 = scalar_select 0, %s8, %s6
  $region1: #{thermal_gcn_forward.1} parent=0
    #allocation2 [shape = 'u8[2048]{0}', space=vmem, size = 0x800, scoped, tag = 'input window, operand 2, single buffered']
    #allocation3 [shape = 's32[1]{0}', space=sflag, size = 0x4, scoped, tag = 'scoped memory for thermal_gcn_forward.1']
    #allocation4 [shape = 'u8[6144]{0}', space=vmem, size = 0x1800, scoped, tag = 'input window, operand 4, single buffered']
    #allocation5 [shape = 's32[1]{0}', space=sflag, size = 0x4, scoped, tag = 'scoped memory for thermal_gcn_forward.1']
    %10 = vsyncpa [#allocation3], 0
    %11 = vsyncpa [#allocation5], 0
    // Predicated region
    $region2: #{thermal_gcn_forward.1} parent=1 // pred_check
      _
    $region3: #{thermal_gcn_forward.1} parent=1 // pred_check_branch
      %13 = sbr.rel (0) target = $region5
    $region4: #{thermal_gcn_forward.1} parent=1 // pred_region
      _
    $region5: #{thermal_gcn_forward.1} parent=1 // pred_fallthru
      _
    // Predicated region
    $region6: #{thermal_gcn_forward.1} parent=1 // pred_check
      _
    $region7: #{thermal_gcn_forward.1} parent=1 // pred_check_branch
      %15 = sbr.rel (0) target = $region9
    $region8: #{thermal_gcn_forward.1} parent=1 // pred_region
      _
    $region9: #{thermal_gcn_forward.1} parent=1 // pred_fallthru
      _
    // Predicated region
    $region10: #{thermal_gcn_forward.1} parent=1 // pred_check
      _
    $region11: #{thermal_gcn_forward.1} parent=1 // pred_check_branch
      %17 = sbr.rel (0) target = $region13
    $region12: #{thermal_gcn_forward.1} parent=1 // pred_region
      %s19 = ssub.s32 64, 64
      %20 = vsyncadd [#allocation3], %s19
      %s22 = sshll.u32 [#allocation2], 4
      %s23 = int_to_ptr.vmem [resolvable:$true] %s22
      %25 = dma.hbm_to_vmem [thread:$0]  %s2, 64, %s23, [#allocation3]
    $region13: #{thermal_gcn_forward.1} parent=1 // pred_fallthru
      _
    // Predicated region
    $region14: #{thermal_gcn_forward.1} parent=1 // pred_check
      _
    $region15: #{thermal_gcn_forward.1} parent=1 // pred_check_branch
      %27 = sbr.rel (0) target = $region17
    $region16: #{thermal_gcn_forward.1} parent=1 // pred_region
      _
    $region17: #{thermal_gcn_forward.1} parent=1 // pred_fallthru
      _
    // Predicated region
    $region18: #{thermal_gcn_forward.1} parent=1 // pred_check
      _
    $region19: #{thermal_gcn_forward.1} parent=1 // pred_check_branch
      %29 = sbr.rel (0) target = $region21
    $region20: #{thermal_gcn_forward.1} parent=1 // pred_region
      %s31 = ssub.s32 192, 192
      %32 = vsyncadd [#allocation5], %s31
      %s33 = sshll.u32 [#allocation4], 4
      %s34 = int_to_ptr.vmem [resolvable:$true] %s33
      %39 = dma.hbm_to_vmem [thread:$0]  %s4, 192, %s34, [#allocation5], 64, 64, 4
    $region21: #{thermal_gcn_forward.1} parent=1 // pred_fallthru
      _
    // Predicated region
    $region22: #{thermal_gcn_forward.1} parent=1 // pred_check
      _
    $region23: #{thermal_gcn_forward.1} parent=1 // pred_check_branch
      %41 = sbr.rel (0) target = $region25
    $region24: #{thermal_gcn_forward.1} parent=1 // pred_region
      %42 = dma.done [#allocation3], 64
    $region25: #{thermal_gcn_forward.1} parent=1 // pred_fallthru
      _
    // Predicated region
    $region26: #{thermal_gcn_forward.1} parent=1 // pred_check
      _
    $region27: #{thermal_gcn_forward.1} parent=1 // pred_check_branch
      %44 = sbr.rel (0) target = $region29
    $region28: #{thermal_gcn_forward.1} parent=1 // pred_region
      %45 = dma.done [#allocation5], 192
    $region29: #{thermal_gcn_forward.1} parent=1 // pred_fallthru
      _
    %v46 = vld [vmem:[%s1] sm:$0x3f]
    %v47 = vld [vmem:[#allocation4] sm:$0xf]
    %v48 = vld [vmem:[%s0] sm:$0xff]
    %50 = vset.pattern.permute.xlu0 0
    %51 = vperm.xlu0 %50, %v46
    %v52 = vpop.permute.xlu0 %51
    %v54 = vlaneseq
    %v55 = vshrl.u32 %v54, 7
    %v56 = vsub.s32 0, %v55
    %v57 = vrot.slane %v47, %v56
    %v58 = vmul.f32 %v52, %v57
    %59 = vset.pattern.permute.xlu0 1
    %60 = vperm.xlu0 %59, %v46
    %v61 = vpop.permute.xlu0 %60
    %v63 = vlaneseq
    %v64 = vshrl.u32 %v63, 7
    %v65 = vsub.s32 1, %v64
    %v66 = vrot.slane %v47, %v65
    %v67 = vmul.f32 %v61, %v66
    %v68 = vadd.f32 %v58, %v67
    %70 = vset.pattern.permute.xlu0 0
    %71 = vperm.xlu0 %70, %v48
    %v72 = vpop.permute.xlu0 %71
    %v74 = vlaneseq
    %v75 = vshrl.u32 %v74, 7
    %v76 = vsub.s32 0, %v75
    %v77 = vrot.slane %v68, %v76
    %v78 = vmul.f32 %v72, %v77
    %79 = vset.pattern.permute.xlu0 1
    %80 = vperm.xlu0 %79, %v48
    %v81 = vpop.permute.xlu0 %80
    %v83 = vlaneseq
    %v84 = vshrl.u32 %v83, 7
    %v85 = vsub.s32 1, %v84
    %v86 = vrot.slane %v68, %v85
    %v87 = vmul.f32 %v81, %v86
    %v88 = vadd.f32 %v78, %v87
    %89 = vset.pattern.permute.xlu0 2
    %90 = vperm.xlu0 %89, %v48
    %v91 = vpop.permute.xlu0 %90
    %v93 = vlaneseq
    %v94 = vshrl.u32 %v93, 7
    %v95 = vsub.s32 2, %v94
    %v96 = vrot.slane %v68, %v95
    %v97 = vmul.f32 %v91, %v96
    %v98 = vadd.f32 %v88, %v97
    %99 = vset.pattern.permute.xlu0 3
    %100 = vperm.xlu0 %99, %v48
    %v101 = vpop.permute.xlu0 %100
    %v103 = vlaneseq
    %v104 = vshrl.u32 %v103, 7
    %v105 = vsub.s32 3, %v104
    %v106 = vrot.slane %v68, %v105
    %v107 = vmul.f32 %v101, %v106
    %v108 = vadd.f32 %v98, %v107
    %109 = vset.pattern.permute.xlu0 4
    %110 = vperm.xlu0 %109, %v48
    %v111 = vpop.permute.xlu0 %110
    %v113 = vlaneseq
    %v114 = vshrl.u32 %v113, 7
    %v115 = vsub.s32 4, %v114
    %v116 = vrot.slane %v68, %v115
    %v117 = vmul.f32 %v111, %v116
    %v118 = vadd.f32 %v108, %v117
    %119 = vset.pattern.permute.xlu0 5
    %120 = vperm.xlu0 %119, %v48
    %v121 = vpop.permute.xlu0 %120
    %v123 = vlaneseq
    %v124 = vshrl.u32 %v123, 7
    %v125 = vsub.s32 5, %v124
    %v126 = vrot.slane %v68, %v125
    %v127 = vmul.f32 %v121, %v126
    %v128 = vadd.f32 %v118, %v127
    %v129 = vlaneseq
    %v130 = vshrl.u32 %v129, 7
    %v131 = vsub.s32 3, %v130
    %v132 = vrot.slane %v47, %v131
    %v133 = vadd.f32 %v128, %v132
    %v134 = vmax.f32 %v133, 0.0
    %135 = vst [vmem:[%s5] sm:$0xff] %v134
    %v136 = vld [vmem:[#allocation2] sm:$0x7]
    %s137 = scalar_lea.vmem [#allocation4], 4
    %v138 = vld [vmem:[%s137] sm:$0xf]
    %s139 = scalar_lea.vmem %s0, 8
    %v140 = vld [vmem:[%s139] sm:$0xff]
    %142 = vset.pattern.permute.xlu0 0
    %143 = vperm.xlu0 %142, %v136
    %v144 = vpop.permute.xlu0 %143
    %v146 = vlaneseq
    %v147 = vshrl.u32 %v146, 7
    %v148 = vsub.s32 0, %v147
    %v149 = vrot.slane %v138, %v148
    %v150 = vmul.f32 %v144, %v149
    %151 = vset.pattern.permute.xlu0 1
    %152 = vperm.xlu0 %151, %v136
    %v153 = vpop.permute.xlu0 %152
    %v155 = vlaneseq
    %v156 = vshrl.u32 %v155, 7
    %v157 = vsub.s32 1, %v156
    %v158 = vrot.slane %v138, %v157
    %v159 = vmul.f32 %v153, %v158
    %v160 = vadd.f32 %v150, %v159
    %161 = vset.pattern.permute.xlu0 2
    %162 = vperm.xlu0 %161, %v136
    %v163 = vpop.permute.xlu0 %162
    %v165 = vlaneseq
    %v166 = vshrl.u32 %v165, 7
    %v167 = vsub.s32 2, %v166
    %v168 = vrot.slane %v138, %v167
    %v169 = vmul.f32 %v163, %v168
    %v170 = vadd.f32 %v160, %v169
    %172 = vset.pattern.permute.xlu0 0
    %173 = vperm.xlu0 %172, %v140
    %v174 = vpop.permute.xlu0 %173
    %v176 = vlaneseq
    %v177 = vshrl.u32 %v176, 7
    %v178 = vsub.s32 0, %v177
    %v179 = vrot.slane %v170, %v178
    %v180 = vmul.f32 %v174, %v179
    %181 = vset.pattern.permute.xlu0 1
    %182 = vperm.xlu0 %181, %v140
    %v183 = vpop.permute.xlu0 %182
    %v185 = vlaneseq
    %v186 = vshrl.u32 %v185, 7
    %v187 = vsub.s32 1, %v186
    %v188 = vrot.slane %v170, %v187
    %v189 = vmul.f32 %v183, %v188
    %v190 = vadd.f32 %v180, %v189
    %191 = vset.pattern.permute.xlu0 2
    %192 = vperm.xlu0 %191, %v140
    %v193 = vpop.permute.xlu0 %192
    %v195 = vlaneseq
    %v196 = vshrl.u32 %v195, 7
    %v197 = vsub.s32 2, %v196
    %v198 = vrot.slane %v170, %v197
    %v199 = vmul.f32 %v193, %v198
    %v200 = vadd.f32 %v190, %v199
    %v201 = vlaneseq
    %v202 = vshrl.u32 %v201, 7
    %v203 = vsub.s32 3, %v202
    %v204 = vrot.slane %v138, %v203
    %v205 = vadd.f32 %v200, %v204
    %v206 = vmax.f32 %v205, 0.0
    %s207 = scalar_lea.vmem %s5, 8
    %208 = vst [vmem:[%s207] sm:$0xff] %v206
    %v209 = vld [vmem:[%s3] sm:$0x3]
    %s210 = scalar_lea.vmem [#allocation4], 8
    %v211 = vld [vmem:[%s210] sm:$0xf]
    %s212 = scalar_lea.vmem %s0, 16
    %v213 = vld [vmem:[%s212] sm:$0xff]
    %215 = vset.pattern.permute.xlu0 0
    %216 = vperm.xlu0 %215, %v209
    %v217 = vpop.permute.xlu0 %216
    %v219 = vlaneseq
    %v220 = vshrl.u32 %v219, 7
    %v221 = vsub.s32 0, %v220
    %v222 = vrot.slane %v211, %v221
    %v223 = vmul.f32 %v217, %v222
    %225 = vset.pattern.permute.xlu0 0
    %226 = vperm.xlu0 %225, %v213
    %v227 = vpop.permute.xlu0 %226
    %v229 = vlaneseq
    %v230 = vshrl.u32 %v229, 7
    %v231 = vsub.s32 0, %v230
    %v232 = vrot.slane %v223, %v231
    %v233 = vmul.f32 %v227, %v232
    %234 = vset.pattern.permute.xlu0 1
    %235 = vperm.xlu0 %234, %v213
    %v236 = vpop.permute.xlu0 %235
    %v238 = vlaneseq
    %v239 = vshrl.u32 %v238, 7
    %v240 = vsub.s32 1, %v239
    %v241 = vrot.slane %v223, %v240
    %v242 = vmul.f32 %v236, %v241
    %v243 = vadd.f32 %v233, %v242
    %v244 = vlaneseq
    %v245 = vshrl.u32 %v244, 7
    %v246 = vsub.s32 3, %v245
    %v247 = vrot.slane %v211, %v246
    %v248 = vadd.f32 %v243, %v247
    %v249 = vmax.f32 %v248, 0.0
    %s250 = scalar_lea.vmem %s5, 16
    %251 = vst [vmem:[%s250] sm:$0xff] %v249
    // Predicated region
    $region30: #{thermal_gcn_forward.1} parent=1 // pred_check
      _
    $region31: #{thermal_gcn_forward.1} parent=1 // pred_check_branch
      %253 = sbr.rel (0) target = $region33
    $region32: #{thermal_gcn_forward.1} parent=1 // pred_region
      _
    $region33: #{thermal_gcn_forward.1} parent=1 // pred_fallthru
      _
    // Predicated region
    $region34: #{thermal_gcn_forward.1} parent=1 // pred_check
      _
    $region35: #{thermal_gcn_forward.1} parent=1 // pred_check_branch
      %255 = sbr.rel (0) target = $region37
    $region36: #{thermal_gcn_forward.1} parent=1 // pred_region
      _
    $region37: #{thermal_gcn_forward.1} parent=1 // pred_fallthru
      _
    %256 = vsyncpa [#allocation3], 1
    %257 = vsyncpa [#allocation5], 1

</llo_original>
